<compile_context>
chip_gen: v7x
topology: tpu7x:2x2x1
jax: 0.10.0
libtpu: 0.0.40
codegen_flags: <defaults>
</compile_context>

<pallas_src>
import functools

import jax
import jax.numpy as jnp
from jax.experimental import pallas as pl
from jax.experimental.pallas import tpu as pltpu


def _lif_kernel(x_ref, o_ref, mem_ref, *, thresh, tau):
    # grid = (batch_tiles, feature_tiles, T); time is the last (serial) axis.
    t = pl.program_id(2)

    @pl.when(t == 0)
    def _():
        # init_mem = 0.0 -- re-zeroed for every spatial tile.
        mem_ref[...] = jnp.zeros_like(mem_ref)

    x = x_ref[...].astype(jnp.float32)           # (TN, TF) tile
    if tau == 1.0:                               # trace-time specialization
        mem = mem_ref[...] + x
    else:
        mem = tau * mem_ref[...] + x

    fired = mem >= thresh                        # == (mem - thresh >= 0) for finite f32
    # ZIF.forward: spike = (mem - thresh >= 0).float() * thresh
    spike = jnp.where(fired, jnp.float32(thresh), jnp.float32(0.0))
    # soft reset: mem *= (1 - spike)  ->  mem*(1-thresh) where fired, else mem
    mem_ref[...] = jnp.where(fired, mem * (1.0 - thresh), mem)
    o_ref[...] = spike.astype(o_ref.dtype)


def _largest_aligned_divisor(dim, align, cap):
    """Largest multiple of `align` that divides `dim` and is <= cap (else dim)."""
    cap = max(align, min(cap, dim))
    t = (cap // align) * align
    while t >= align:
        if dim % t == 0:
            return t
        t -= align
    return dim


def lif_buffer_forward(x, T, thresh=1.0, tau=1.0, gama=1.0,
                       vmem_budget_bytes=36 * 1024 * 1024):
    # Layout: PyTorch input x is NCHW with shape (T*B, C, H, W).
    #   ExpandTemporalDim(dim=0) -> (T, B, C, H, W); for the kernel we flatten
    #   to (T, N, F) = (T, B, C*H*W) so the lane dimension is as dense as
    #   possible; MergeTemporalDim -> reshape back to (T*B, C, H, W).
    del gama  # only used in backward (surrogate gradient)
    TB = x.shape[0]
    assert TB % T == 0, "leading dim must be T * batch"
    B = TB // T
    rest = x.shape[1:]
    F = 1
    for d in rest:
        F *= int(d)
    N = B
    xk = jnp.reshape(x, (T, N, F))          # view only -- no dtype cast pass

    out_dtype = x.dtype                      # spikes are exactly {0, thresh}
    in_bytes = jnp.dtype(x.dtype).itemsize
    out_bytes = jnp.dtype(out_dtype).itemsize
    # live VMEM per tile element: 2x double-buffered input + 2x output + f32 mem
    live_per_elem = 2 * in_bytes + 2 * out_bytes + 4
    max_elems = max(8 * 128, vmem_budget_bytes // live_per_elem)

    # Lane (feature) axis: keep it as wide as possible; only split when an
    # 8-row tile would still blow the budget and F is 128-aligned.
    if F % 128 != 0 or F * 8 <= max_elems:
        TF = F
    else:
        TF = _largest_aligned_divisor(F, 128, max(128, max_elems // 8))
    # Sublane (batch) axis: a multiple of 8, or the full extent.
    max_tn = max(8, max_elems // TF)
    if N % 8 == 0 and N > max_tn:
        TN = _largest_aligned_divisor(N, 8, max_tn)
    else:
        TN = N
    n_tiles, f_tiles = N // TN, F // TF

    kern = functools.partial(_lif_kernel, thresh=float(thresh), tau=float(tau))

    out = pl.pallas_call(
        kern,
        out_shape=jax.ShapeDtypeStruct((T, N, F), out_dtype),
        grid_spec=pltpu.PrefetchScalarGridSpec(
            num_scalar_prefetch=0,
            grid=(n_tiles, f_tiles, T),                 # time innermost / serial
            in_specs=[pl.BlockSpec((pl.Squeezed(), TN, TF),
                                   lambda n, f, t: (t, n, f))],
            out_specs=pl.BlockSpec((pl.Squeezed(), TN, TF),
                                   lambda n, f, t: (t, n, f)),
            scratch_shapes=[pltpu.VMEM((TN, TF), jnp.float32)],
        ),
        compiler_params=pltpu.CompilerParams(
            dimension_semantics=("parallel", "parallel", "arbitrary"),
            vmem_limit_bytes=48 * 1024 * 1024,          # safe on v7x (64 MiB phys)
        ),
    )(xk)

    return jnp.reshape(out, (TB,) + rest)


def _lif_reference(x, T, thresh=1.0, tau=1.0):
    TB = x.shape[0]
    B = TB // T
    xe = jnp.reshape(x, (T, B) + x.shape[1:]).astype(jnp.float32)
    mem = jnp.float32(0.0)
    spikes = []
    for t in range(T):
        mem = tau * mem + xe[t]
        spike = (mem - thresh >= 0.0).astype(jnp.float32) * thresh
        mem = mem * (1.0 - spike)
        spikes.append(spike)
    return jnp.reshape(jnp.stack(spikes, axis=0), x.shape)


if __name__ == "__main__":
    # LIF_buffer(T=4, thresh=1.0, tau=1.0, gama=1.0); no learnable parameters.
    T = 4
    B, C, H, W = 2, 4, 16, 16
    key = jax.random.PRNGKey(0)
    # input x: (T*B, C, H, W) NCHW
    x = jax.random.normal(key, (T * B, C, H, W), dtype=jnp.float32) * 2.0

    out = lif_buffer_forward(x, T=T, thresh=1.0, tau=1.0, gama=1.0)
    out = jax.block_until_ready(out)

    ref = _lif_reference(x, T=T, thresh=1.0, tau=1.0)
    assert out.shape == x.shape, (out.shape, x.shape)
    assert jnp.max(jnp.abs(out.astype(jnp.float32) - ref)) < 1e-5, \
        "mismatch vs. reference"

    print("KERNEL_OK")
</pallas_src>

<mosaic_0001>
module attributes {stable_mosaic.version = 11 : i64} {
  func.func @_lif_kernel(%arg0: i32, %arg1: i32, %arg2: i32, %arg3: memref<1x2x1024xf32, #tpu.memory_space<vmem>>, %arg4: memref<1x2x1024xf32, #tpu.memory_space<vmem>>, %arg5: memref<2x1024xf32, #tpu.memory_space<vmem>>) attributes {dimension_semantics = [#tpu.dimension_semantics<parallel>, #tpu.dimension_semantics<parallel>, #tpu.dimension_semantics<arbitrary>], iteration_bounds = array<i64: 1, 1, 4>, scalar_prefetch = 0 : i64, scratch_operands = 1 : i64, tpu.core_type = #tpu.core_type<tc>, window_params = [{transform_indices = @transform_0, window_bounds = array<i64: 1, 2, 1024>}, {transform_indices = @transform_1, window_bounds = array<i64: 1, 2, 1024>}]} {
    %c0_i32 = arith.constant 0 : i32
    %0 = arith.cmpi eq, %arg2, %c0_i32 : i32
    %1 = arith.extui %0 : i1 to i32
    %c0_i32_0 = arith.constant 0 : i32
    %2 = arith.cmpi ne, %1, %c0_i32_0 : i32
    scf.if %2 {
      %cst_13 = arith.constant 0.000000e+00 : f32
      %19 = vector.broadcast %cst_13 : f32 to vector<2x1024xf32>
      %c0_14 = arith.constant 0 : index
      %c0_15 = arith.constant 0 : index
      %20 = vector.load %arg5[%c0_14, %c0_15] : memref<2x1024xf32, #tpu.memory_space<vmem>>, vector<2x1024xf32>
      tpu.vector_store %arg5[%c0_14, %c0_15], %19 {strides = array<i32>} : memref<2x1024xf32, #tpu.memory_space<vmem>>, vector<2x1024xf32>,
    } else {
    }
    %c0 = arith.constant 0 : index
    %c0_1 = arith.constant 0 : index
    %c0_2 = arith.constant 0 : index
    %3 = vector.load %arg3[%c0, %c0_1, %c0_2] : memref<1x2x1024xf32, #tpu.memory_space<vmem>>, vector<1x2x1024xf32>
    %4 = vector.shape_cast %3 : vector<1x2x1024xf32> to vector<2x1024xf32>
    %c0_3 = arith.constant 0 : index
    %c0_4 = arith.constant 0 : index
    %5 = vector.load %arg5[%c0_3, %c0_4] : memref<2x1024xf32, #tpu.memory_space<vmem>>, vector<2x1024xf32>
    %6 = arith.addf %5, %4 : vector<2x1024xf32>
    %cst = arith.constant 1.000000e+00 : f32
    %7 = vector.broadcast %cst : f32 to vector<2x1024xf32>
    %8 = arith.cmpf oge, %6, %7 : vector<2x1024xf32>
    %cst_5 = arith.constant 1.000000e+00 : f32
    %cst_6 = arith.constant 0.000000e+00 : f32
    %9 = vector.broadcast %cst_5 : f32 to vector<2x1024xf32>
    %10 = vector.broadcast %cst_6 : f32 to vector<2x1024xf32>
    %11 = arith.select %8, %9, %10 : vector<2x1024xi1>, vector<2x1024xf32>
    %cst_7 = arith.constant 0.000000e+00 : f32
    %12 = vector.broadcast %cst_7 : f32 to vector<2x1024xf32>
    %13 = arith.mulf %6, %12 : vector<2x1024xf32>
    %14 = arith.select %8, %13, %6 : vector<2x1024xi1>, vector<2x1024xf32>
    %c0_8 = arith.constant 0 : index
    %c0_9 = arith.constant 0 : index
    %15 = vector.load %arg5[%c0_8, %c0_9] : memref<2x1024xf32, #tpu.memory_space<vmem>>, vector<2x1024xf32>
    tpu.vector_store %arg5[%c0_8, %c0_9], %14 {strides = array<i32>} : memref<2x1024xf32, #tpu.memory_space<vmem>>, vector<2x1024xf32>,
    %c0_10 = arith.constant 0 : index
    %c0_11 = arith.constant 0 : index
    %c0_12 = arith.constant 0 : index
    %16 = vector.load %arg4[%c0_10, %c0_11, %c0_12] : memref<1x2x1024xf32, #tpu.memory_space<vmem>>, vector<1x2x1024xf32>
    %17 = vector.shape_cast %16 : vector<1x2x1024xf32> to vector<2x1024xf32>
    %18 = vector.shape_cast %11 : vector<2x1024xf32> to vector<1x2x1024xf32>
    tpu.vector_store %arg4[%c0_10, %c0_11, %c0_12], %18 {strides = array<i32>} : memref<1x2x1024xf32, #tpu.memory_space<vmem>>, vector<1x2x1024xf32>,
    return
  }
  func.func @transform_0(%arg0: i32, %arg1: i32, %arg2: i32) -> (i32, i32, i32) {
    %c0_i32 = arith.constant 0 : i32
    return %arg2, %arg0, %arg1 : i32, i32, i32
  }
  func.func @transform_1(%arg0: i32, %arg1: i32, %arg2: i32) -> (i32, i32, i32) {
    %c0_i32 = arith.constant 0 : i32
    return %arg2, %arg0, %arg1 : i32, i32, i32
  }
}

</mosaic_0001>

<llo_original>
// kernel: tpu_custom_call.1
$region0: #{tpu_custom_call.1}
  #allocation0 [shape = 'u32[]', space=smem, size = 0x4, offset = 0x4, fixed_abs, tag = 'smem constant byte address 0x4 - core index']
  #allocation1 [shape = 'u32[144,128]{1,0:T(1,128)}', space=vmem, size = 0x12000, scoped, tag = 'internal scratch']
  #allocation2 [shape = 'f32[2,1024]{1,0:T(2,128)}', space=vmem, size = 0x2000, scoped, tag = 'scratch operand']
  %s0 = inlined_call_operand.hbm [shape: f32[4,2,1024], index: 0, kind: input, shape index: {}]
  %s1 = inlined_call_operand.hbm [shape: f32[4,2,1024], index: 1, kind: output, shape index: {}]
  %s2 = sld [smem:[#allocation0]]
  $region45: #{tpu_custom_call.1} parent=0
    _
  %s4 = ssub.s32 1, %s2
  %s5 = scalar_select 0, %s4, %s2
  $region1: #{tpu_custom_call.1} parent=0
    #allocation3 [shape = 'u8[16384]{0}', space=vmem, size = 0x4000, scoped, tag = 'input window, operand 0']
    #allocation4 [shape = 's32[2]{0}', space=sflag, size = 0x8, scoped, tag = 'scoped memory for tpu_custom_call.1']
    #allocation5 [shape = 's32[2]{0}', space=sflag, size = 0x8, scoped, tag = 'scoped memory for tpu_custom_call.1']
    #allocation6 [shape = 'u8[16384]{0}', space=vmem, size = 0x4000, scoped, tag = 'output window, operand 0']
    %6 = vsyncpa [#allocation4], 0
    %s7 = scalar_lea.sflag [#allocation4], 1
    %8 = vsyncpa %s7, 0
    %9 = vsyncpa [#allocation5], 0
    %s10 = scalar_lea.sflag [#allocation5], 1
    %11 = vsyncpa %s10, 0
    loop: start=0, step=1, limit=6
    $region2: #{tpu_custom_call.1} parent=1 // loop_pre_header
      _
    $region3: #{tpu_custom_call.1} parent=1 // loop_header
      %s13 = sphi 0, %s17
      %p14 = scmp.ge.s32.totalorder %s13, 6
      %s20 = sphi 0, %s39
      %s21 = sphi 0, %s35
      %s22 = sphi 0, %s31
      %s23 = sphi 0, %s20
      %s24 = sphi 0, %s21
      %s25 = sphi 0, %s22
      %s26 = sphi 0, %s23
      %s27 = sphi 0, %s24
      %s28 = sphi 0, %s25
      %s46 = sphi 0, %s48
      %s49 = sphi 0, %s46
      %s50 = sphi 0, %s49
      %s66 = sphi 0, %s50
      %s76 = sphi 0, %s78
      %s79 = sphi 0, %s76
      %s80 = sphi 0, %s79
      %s96 = sphi 0, %s80
    $region4: #{tpu_custom_call.1} parent=1 // loop_header_branch
      %16 = sbr.rel (%p14) target = $region8
    $region5: #{tpu_custom_call.1} parent=1 // loop_body
      %s18 = ssub.s32 %s13, 1
      %s19 = ssub.s32 %s13, 2
      %s29 = sadd.s32 1, %s22
      %p30 = scmp.ge.s32.totalorder %s29, 4
      %s31 = scalar_select %p30, 0, %s29
      %s32 = sadd.s32 1, %s21
      %s33 = scalar_select %p30, %s32, %s21
      %p34 = scmp.ge.s32.totalorder %s33, 1
      %s35 = scalar_select %p34, 0, %s33
      %s36 = sadd.s32 1, %s20
      %s37 = scalar_select %p34, %s36, %s20
      %p38 = scmp.ge.s32.totalorder %s37, 1
      %s39 = scalar_select %p38, 0, %s37
      %s40 = ssub.s32 %s22, %s31
      %s41 = ssub.s32 %s20, %s39
      %s42 = sor.u32 %s40, %s41
      %s43 = ssub.s32 %s21, %s35
      %s44 = sor.u32 %s42, %s43
      %p45 = scmp.eq.s32.totalorder %s44, 0
      %s47 = sadd.s32 %s46, 1
      %s48 = scalar_select %p45, %s46, %s47
      %p51 = pneg %p45
      %p52 = scmp.eq.s32.totalorder %s13, 3
      %p53 = por %p51, %p52
      %p54 = scmp.ne.s32.totalorder %s46, %s49
      %p55 = scmp.eq.s32.totalorder %s13, 0
      %p56 = por %p54, %p55
      %p57 = scmp.ne.s32.totalorder %s46, %s49
      %p58 = scmp.eq.s32.totalorder %s18, 3
      %p59 = por %p57, %p58
      %p60 = scmp.ne.s32.totalorder %s49, %s50
      %p61 = scmp.eq.s32.totalorder %s18, 0
      %p62 = por %p60, %p61
      %p63 = scmp.ne.s32.totalorder %s49, %s50
      %p64 = scmp.eq.s32.totalorder %s19, 3
      %p65 = por %p63, %p64
      %p67 = scmp.ne.s32.totalorder %s50, %s66
      %p68 = scmp.eq.s32.totalorder %s19, 0
      %p69 = por %p67, %p68
      %s70 = ssub.s32 %s22, %s31
      %s71 = ssub.s32 %s20, %s39
      %s72 = sor.u32 %s70, %s71
      %s73 = ssub.s32 %s21, %s35
      %s74 = sor.u32 %s72, %s73
      %p75 = scmp.eq.s32.totalorder %s74, 0
      %s77 = sadd.s32 %s76, 1
      %s78 = scalar_select %p75, %s76, %s77
      %p81 = pneg %p75
      %p82 = scmp.eq.s32.totalorder %s13, 3
      %p83 = por %p81, %p82
      %p84 = scmp.ne.s32.totalorder %s76, %s79
      %p85 = scmp.eq.s32.totalorder %s13, 0
      %p86 = por %p84, %p85
      %p87 = scmp.ne.s32.totalorder %s76, %s79
      %p88 = scmp.eq.s32.totalorder %s18, 3
      %p89 = por %p87, %p88
      %p90 = scmp.ne.s32.totalorder %s79, %s80
      %p91 = scmp.eq.s32.totalorder %s18, 0
      %p92 = por %p90, %p91
      %p93 = scmp.ne.s32.totalorder %s79, %s80
      %p94 = scmp.eq.s32.totalorder %s19, 3
      %p95 = por %p93, %p94
      %p97 = scmp.ne.s32.totalorder %s80, %s96
      %p98 = scmp.eq.s32.totalorder %s19, 0
      %p99 = por %p97, %p98
      %p100 = scmp.le.s32.totalorder 1, %s13
      %p101 = scmp.lt.s32.totalorder %s13, 5
      %p102 = pnand %p100, %p101
      %p103 = pneg %p102
      // Predicated region
      $region9: #{tpu_custom_call.1} parent=5 // pred_check
        _
      $region10: #{tpu_custom_call.1} parent=5 // pred_check_branch
        %105 = sbr.rel (%p102) target = $region12
      $region11: #{tpu_custom_call.1} parent=5 // pred_region
        %s106 = ssub.s32 %s13, 1
      $region12: #{tpu_custom_call.1} parent=5 // pred_fallthru
        _
      %p107 = scmp.lt.s32.totalorder %s13, 4
      // Predicated region
      $region13: #{tpu_custom_call.1} parent=5 // pred_check
        %p108 = pneg %p107
      $region14: #{tpu_custom_call.1} parent=5 // pred_check_branch
        %110 = sbr.rel (%p108) target = $region16
      $region15: #{tpu_custom_call.1} parent=5 // pred_region
        // Predicated region
        $region17: #{tpu_custom_call.1} parent=15 // pred_check
          %p111 = pneg %p56
        $region18: #{tpu_custom_call.1} parent=15 // pred_check_branch
          %113 = sbr.rel (%p111) target = $region20
        $region19: #{tpu_custom_call.1} parent=15 // pred_region
          %s114 = sand.u32 %s46, 1
          %s115 = scalar_lea.sflag [#allocation4], %s114
          %s116 = sand.u32 %s46, 1
          %s117 = smul.addr %s116, 16
          %s118 = scalar_lea.vmem [#allocation3], %s117
          %s119 = smul.u32 8, %s21
          %s121 = ssub.s32 256, 256
          %122 = vsyncadd %s115, %s121
          %s123 = smul.addr %s20, 8
          %s124 = sadd.s32 %s119, %s123
          %s125 = smul.addr %s22, 8
          %s126 = sadd.s32 %s124, %s125
          %s127 = smul.addr %s126, 32
          %s128 = scalar_lea.hbm %s0, %s127
          %s130 = sshll.u32 %s118, 4
          %s131 = int_to_ptr.vmem [resolvable:$true] %s130
          %133 = dma.hbm_to_vmem [thread:$0]  %s128, 256, %s131, %s115
        $region20: #{tpu_custom_call.1} parent=15 // pred_fallthru
          _
      $region16: #{tpu_custom_call.1} parent=5 // pred_fallthru
        _
      %p134 = scmp.le.s32.totalorder 1, %s13
      %p135 = scmp.lt.s32.totalorder %s13, 5
      %p136 = pnand %p134, %p135
      %p137 = pneg %p136
      // Predicated region
      $region21: #{tpu_custom_call.1} parent=5 // pred_check
        _
      $region22: #{tpu_custom_call.1} parent=5 // pred_check_branch
        %139 = sbr.rel (%p136) target = $region24
      $region23: #{tpu_custom_call.1} parent=5 // pred_region
        %s140 = ssub.s32 %s13, 1
        %s141 = sand.u32 %s49, 1
        %s142 = scalar_lea.sflag [#allocation4], %s141
        %s143 = sand.u32 %s49, 1
        %s144 = smul.addr %s143, 16
        %s145 = scalar_lea.vmem [#allocation3], %s144
        // Predicated region
        $region25: #{tpu_custom_call.1} parent=23 // pred_check
          %p146 = pneg %p62
        $region26: #{tpu_custom_call.1} parent=23 // pred_check_branch
          %148 = sbr.rel (%p146) target = $region28
        $region27: #{tpu_custom_call.1} parent=23 // pred_region
          %149 = dma.done %s142, 256
        $region28: #{tpu_custom_call.1} parent=23 // pred_fallthru
          _
        %s150 = sand.u32 %s49, 1
        %s151 = scalar_lea.sflag [#allocation4], %s150
        %s152 = sand.u32 %s49, 1
        %s153 = smul.addr %s152, 16
        %s154 = scalar_lea.vmem [#allocation3], %s153
        %p155 = pneg %p62
        %p156 = pneg %p59
        %p157 = pneg %p92
        %p158 = pneg %p89
        %s159 = sand.u32 %s79, 1
        %s160 = scalar_lea.sflag [#allocation5], %s159
        %s161 = sand.u32 %s79, 1
        %s162 = smul.addr %s161, 16
        %s163 = scalar_lea.vmem [#allocation6], %s162
        %s164 = smul.u32 8, %s24
        %s165 = smul.u32 8, %s24
        %p166 = scmp.eq.s32.totalorder %s25, 0
        // Predicated region
        $region29: #{tpu_custom_call.1} parent=23 // pred_check
          %p167 = pneg %p166
        $region30: #{tpu_custom_call.1} parent=23 // pred_check_branch
          %169 = sbr.rel (%p167) target = $region32
        $region31: #{tpu_custom_call.1} parent=23 // pred_region
          %170 = vst [vmem:[#allocation2] sm:$0xff] 0.0
          %171 = vst [vmem:[#allocation2 + $0x8] sm:$0xff] 0.0
        $region32: #{tpu_custom_call.1} parent=23 // pred_fallthru
          _
        %v172 = vld [vmem:[%s145] sm:$0xff]
        %v173 = vld [vmem:[%s145 + $0x8] sm:$0xff]
        %v174 = vld [vmem:[#allocation2] sm:$0xff]
        %v175 = vld [vmem:[#allocation2 + $0x8] sm:$0xff]
        %v176 = vadd.f32 %v174, %v172
        %v177 = vadd.f32 %v175, %v173
        %vm178 = vcmp.ge.f32.partialorder %v176, 1.0
        %vm179 = vcmp.ge.f32.partialorder %v177, 1.0
        %v180 = vsel %vm178, 1.0, 0.0
        %v181 = vsel %vm179, 1.0, 0.0
        %v182 = vmul.f32 %v176, 0.0
        %v183 = vmul.f32 %v177, 0.0
        %v184 = vsel %vm178, %v182, %v176
        %v185 = vsel %vm179, %v183, %v177
        %186 = vst [vmem:[#allocation2] sm:$0xff] %v184
        %187 = vst [vmem:[#allocation2 + $0x8] sm:$0xff] %v185
        %188 = vst [vmem:[%s163] sm:$0xff] %v180
        %189 = vst [vmem:[%s163 + $0x8] sm:$0xff] %v181
        %s190 = sand.u32 %s79, 1
        %s191 = scalar_lea.sflag [#allocation5], %s190
        %s192 = sand.u32 %s79, 1
        %s193 = smul.addr %s192, 16
        %s194 = scalar_lea.vmem [#allocation6], %s193
        // Predicated region
        $region33: #{tpu_custom_call.1} parent=23 // pred_check
          %p195 = pneg %p89
        $region34: #{tpu_custom_call.1} parent=23 // pred_check_branch
          %197 = sbr.rel (%p195) target = $region36
        $region35: #{tpu_custom_call.1} parent=23 // pred_region
          %s198 = smul.u32 8, %s24
          %s200 = ssub.s32 256, 256
          %201 = vsyncadd %s191, %s200
          %s202 = smul.addr %s23, 8
          %s203 = sadd.s32 %s198, %s202
          %s204 = smul.addr %s25, 8
          %s205 = sadd.s32 %s203, %s204
          %s206 = smul.addr %s205, 32
          %s207 = scalar_lea.hbm %s1, %s206
          %s209 = sshll.u32 %s194, 4
          %s210 = int_to_ptr.vmem [resolvable:$true] %s209
          %212 = dma.vmem_to_hbm [thread:$0]  %s210, 256, %s207, %s191
        $region36: #{tpu_custom_call.1} parent=23 // pred_fallthru
          _
      $region24: #{tpu_custom_call.1} parent=5 // pred_fallthru
        _
      %p213 = scmp.le.s32.totalorder 2, %s13
      // Predicated region
      $region37: #{tpu_custom_call.1} parent=5 // pred_check
        %p214 = pneg %p213
      $region38: #{tpu_custom_call.1} parent=5 // pred_check_branch
        %216 = sbr.rel (%p214) target = $region40
      $region39: #{tpu_custom_call.1} parent=5 // pred_region
        %s217 = ssub.s32 %s13, 2
        // Predicated region
        $region41: #{tpu_custom_call.1} parent=39 // pred_check
          %p218 = pneg %p95
        $region42: #{tpu_custom_call.1} parent=39 // pred_check_branch
          %220 = sbr.rel (%p218) target = $region44
        $region43: #{tpu_custom_call.1} parent=39 // pred_region
          %s221 = sand.u32 %s80, 1
          %s222 = scalar_lea.sflag [#allocation5], %s221
          %s223 = sand.u32 %s80, 1
          %s224 = smul.addr %s223, 16
          %s225 = scalar_lea.vmem [#allocation6], %s224
          %226 = dma.done %s222, 256
        $region44: #{tpu_custom_call.1} parent=39 // pred_fallthru
          _
      $region40: #{tpu_custom_call.1} parent=5 // pred_fallthru
        _
    $region6: #{tpu_custom_call.1} parent=1 // loop_footer
      %s17 = sadd.s32 1, %s13
    $region7: #{tpu_custom_call.1} parent=1 // loop_footer_branch
      %12 = sbr.rel target = $region3
    $region8: #{tpu_custom_call.1} parent=1 // loop_exit
      _
    %227 = vsyncpa [#allocation4], 1
    %s228 = scalar_lea.sflag [#allocation4], 1
    %229 = vsyncpa %s228, 1
    %230 = vsyncpa [#allocation5], 1
    %s231 = scalar_lea.sflag [#allocation5], 1
    %232 = vsyncpa %s231, 1

</llo_original>
